<compile_context>
chip_gen: v5e
topology: v5e:2x2
jax: 0.10.0
libtpu: 0.0.40
codegen_flags: <defaults>
</compile_context>

<pallas_src>
import functools

import jax
import jax.numpy as jnp
from jax.experimental import pallas as pl
from jax.experimental.pallas import tpu as pltpu


def _round_up(x, m):
    return ((x + m - 1) // m) * m


def _qmaxdet_kernel(num_hidden, lb, ub, obs_ref, act_ref, *refs):
    """refs = (w0_obs, w0_act, b0, w1, b1, ..., wq, bq, out_ref)."""
    out_ref = refs[-1]
    p = refs[:-1]

    obs = obs_ref[...].astype(jnp.float32)
    act = act_ref[...].astype(jnp.float32)

    # First Linear with the concat fused as a split matmul:
    #   concat([obs, act], -1) @ W0 == obs @ W0[:obs_dim] + act @ W0[obs_dim:]
    h = (
        jnp.dot(obs, p[0][...], preferred_element_type=jnp.float32)
        + jnp.dot(act, p[1][...], preferred_element_type=jnp.float32)
        + p[2][...]
    )

    idx = 3
    if num_hidden > 0:
        # The first linear above was a hidden layer -> ReLU it.
        h = jnp.maximum(h, 0.0)
        # Remaining hidden Linear + ReLU layers.
        for _ in range(1, num_hidden):
            w = p[idx][...]
            b = p[idx + 1][...]
            idx += 2
            h = jnp.maximum(
                jnp.dot(h, w, preferred_element_type=jnp.float32) + b, 0.0
            )
        # Q head: (tm, hidden) @ (hidden, 1) -> (tm, 1)
        h = (
            jnp.dot(h, p[idx][...], preferred_element_type=jnp.float32)
            + p[idx + 1][...]
        )
    # else: the first (split) linear WAS the Q head already.

    # Lane-dense epilogue: relayout (tm, 1) -> (1, tm) (one small XLU
    # transpose) so tanh/scale and the store run on dense 128-lane vregs.
    q = jnp.transpose(h)                       # (1, tm)
    q = jnp.tanh(q - 1.0)
    q = (q * (ub - lb) + (ub + lb)) * 0.5
    out_ref[0] = q.astype(out_ref.dtype)       # out_ref block is (1, 1, tm)


def init_qmaxdet_params(key, observation_dim, action_dim, hidden_dims_list):
    """Deterministic init mimicking nn.Linear's U(-1/sqrt(fan_in), 1/sqrt(fan_in)).

    Weights are stored already transposed: shape (in_dim, out_dim).
    Biases are stored as (1, out_dim) for clean 2-D broadcasting in-kernel.
    """
    params = []
    in_dim = observation_dim + action_dim
    dims = list(hidden_dims_list) + [1]
    for out_dim in dims:
        key, kw, kb = jax.random.split(key, 3)
        bound = 1.0 / jnp.sqrt(jnp.float32(in_dim))
        w = jax.random.uniform(kw, (in_dim, out_dim), jnp.float32, -bound, bound)
        b = jax.random.uniform(kb, (1, out_dim), jnp.float32, -bound, bound)
        params.append((w, b))
        in_dim = out_dim
    return params


def _choose_tm(batch, block_rows):
    """Row-tile size. Big tiles amortize per-step overhead; if the whole batch
    fits in one tile and is big enough, split in 2 so v7x's 2 TCs both work."""
    batch8 = _round_up(batch, 8)
    block_rows = _round_up(max(block_rows, 8), 8)
    if batch8 > block_rows:
        return block_rows
    if batch8 > 256:
        # Cost on single-TC chips: one extra ~0.35us grid step.  Gain on v7x:
        # both TensorCores busy (dimension_semantics=("parallel",)).
        return _round_up((batch8 + 1) // 2, 8)
    return batch8


def _vmem_block_bytes(rows, cols, itemsize):
    """Lane/sublane-padded VMEM footprint of one (rows, cols) block."""
    return (
        _round_up(max(int(rows), 1), 8)
        * _round_up(max(int(cols), 1), 128)
        * int(itemsize)
    )


def qmaxdet_forward(observation, action, params, value_bounds, block_rows=4096):
    """observation: (B, obs_dim), action: (B, act_dim) -> Q_val: (B, 1)."""
    # NOTE: value_bounds are baked as Python floats (trace-time constants),
    # matching the PyTorch module where they are fixed config values.
    lb, ub = float(value_bounds[0]), float(value_bounds[1])
    num_hidden = len(params) - 1  # last entry is the Q head

    obs_dim = observation.shape[-1]
    act_dim = action.shape[-1]
    batch = observation.shape[0]

    # Inputs stay in their native dtype; the kernel upcasts to f32 in VMEM.
    # Split the first layer's weight once in the wrapper so the kernel can
    # fuse the concat as two matmuls.  Params are tiny and VMEM-resident,
    # so keep them f32 for exact-reference math.
    w0, b0 = params[0]
    flat_params = [w0[:obs_dim, :], w0[obs_dim:, :], b0]
    for w, b in params[1:]:
        flat_params.append(w)
        flat_params.append(b)
    flat_params = [jnp.asarray(a, jnp.float32) for a in flat_params]

    # Batch tiling: pad batch so the grid divides evenly.
    tm = _choose_tm(batch, block_rows)
    batch_pad = _round_up(batch, tm)
    if batch_pad != batch:
        pad = batch_pad - batch
        observation = jnp.pad(observation, ((0, pad), (0, 0)))
        action = jnp.pad(action, ((0, pad), (0, 0)))
    grid_m = batch_pad // tm

    in_specs = [
        pl.BlockSpec((tm, obs_dim), lambda i: (i, 0)),
        pl.BlockSpec((tm, act_dim), lambda i: (i, 0)),
    ]
    # Weights/biases: whole-array blocks with a constant index_map -> DMA'd
    # once and kept resident in VMEM across the batch grid.
    for arr in flat_params:
        in_specs.append(pl.BlockSpec(arr.shape, lambda i: (0, 0)))

    # Lane-dense output: one (1, tm) row per grid step, reshaped to (B, 1)
    # in the wrapper (row-major order is preserved).
    out_spec = pl.BlockSpec((1, 1, tm), lambda i: (i, 0, 0))

    # VMEM budget: lane/sublane-padded tiles, double-buffered inputs/output/
    # params, plus f32 intermediates (upcast inputs + each layer's output),
    # with 1.5x headroom.  Clamped to stay under v7x's 64 MiB per-core VMEM.
    in_bytes = 2 * (
        _vmem_block_bytes(tm, obs_dim, observation.dtype.itemsize)
        + _vmem_block_bytes(tm, act_dim, action.dtype.itemsize)
    )
    out_bytes = 2 * _vmem_block_bytes(1, tm, 4)
    param_bytes = 2 * sum(
        _vmem_block_bytes(a.shape[0], a.shape[1], 4) for a in flat_params
    )
    inter_widths = [obs_dim, act_dim] + [w.shape[1] for w, _ in params]
    inter_bytes = sum(_vmem_block_bytes(tm, wdt, 4) for wdt in inter_widths)
    vmem_bytes = int(1.5 * (in_bytes + out_bytes + param_bytes + inter_bytes))
    vmem_bytes = min(max(vmem_bytes, 8 << 20), 64 << 20)

    kernel = functools.partial(_qmaxdet_kernel, num_hidden, lb, ub)

    out = pl.pallas_call(
        kernel,
        out_shape=jax.ShapeDtypeStruct((grid_m, 1, tm), jnp.float32),
        grid=(grid_m,),
        in_specs=in_specs,
        out_specs=out_spec,
        compiler_params=pltpu.CompilerParams(
            dimension_semantics=("parallel",),
            vmem_limit_bytes=vmem_bytes,
        ),
    )(observation, action, *flat_params)

    # (grid, 1, tm) row-major == batch order; drop padded tail rows.
    return out.reshape(batch_pad, 1)[:batch]


def qmaxdet_reference(observation, action, params, value_bounds):
    """Pure-JAX reference of the PyTorch forward, for correctness check."""
    lb, ub = value_bounds
    x = jnp.concatenate([observation, action], axis=-1).astype(jnp.float32)
    for w, b in params[:-1]:
        x = jnp.maximum(x @ w + b, 0.0)
    wq, bq = params[-1]
    q = jnp.tanh(x @ wq + bq - 1.0)
    return (q * (ub - lb) + (ub + lb)) / 2.0


if __name__ == "__main__":
    observation_dim = 16
    action_dim = 8
    hidden_dims_list = [32, 32]
    value_bounds = (-10.0, 10.0)

    key = jax.random.PRNGKey(0)
    k_obs, k_act, k_par, k_obs2, k_act2 = jax.random.split(key, 5)
    params = init_qmaxdet_params(k_par, observation_dim, action_dim, hidden_dims_list)

    # Case 1: small batch (single tile, padded tail: 10 -> tm 16).
    batch = 10
    observation = jax.random.normal(k_obs, (batch, observation_dim), jnp.float32)
    action = jax.random.normal(k_act, (batch, action_dim), jnp.float32)

    q_val = qmaxdet_forward(observation, action, params, value_bounds)
    q_val = jax.block_until_ready(q_val)
    q_ref = qmaxdet_reference(observation, action, params, value_bounds)
    assert q_val.shape == (batch, 1)
    assert jnp.allclose(q_val, q_ref, atol=1e-4, rtol=1e-4), (
        f"mismatch (small batch): {q_val} vs {q_ref}"
    )

    # Case 2: batch big enough to exercise the 2-tile (v7x-friendly) grid and
    # the multi-block lane-dense output path (300 -> tm 152, grid 2).
    batch2 = 300
    observation2 = jax.random.normal(k_obs2, (batch2, observation_dim), jnp.float32)
    action2 = jax.random.normal(k_act2, (batch2, action_dim), jnp.float32)

    q_val2 = qmaxdet_forward(observation2, action2, params, value_bounds)
    q_val2 = jax.block_until_ready(q_val2)
    q_ref2 = qmaxdet_reference(observation2, action2, params, value_bounds)
    assert q_val2.shape == (batch2, 1)
    assert jnp.allclose(q_val2, q_ref2, atol=1e-4, rtol=1e-4), (
        "mismatch (multi-tile batch)"
    )

    print("KERNEL_OK")
</pallas_src>

<mosaic_0001>
module attributes {stable_mosaic.version = 11 : i64} {
  func.func @_qmaxdet_kernel(%arg0: i32, %arg1: memref<16x16xf32, #tpu.memory_space<vmem>>, %arg2: memref<16x8xf32, #tpu.memory_space<vmem>>, %arg3: memref<16x32xf32, #tpu.memory_space<vmem>>, %arg4: memref<8x32xf32, #tpu.memory_space<vmem>>, %arg5: memref<1x32xf32, #tpu.memory_space<vmem>>, %arg6: memref<32x32xf32, #tpu.memory_space<vmem>>, %arg7: memref<1x32xf32, #tpu.memory_space<vmem>>, %arg8: memref<32x1xf32, #tpu.memory_space<vmem>>, %arg9: memref<1x1xf32, #tpu.memory_space<vmem>>, %arg10: memref<1x1x16xf32, #tpu.memory_space<vmem>>) attributes {dimension_semantics = [#tpu.dimension_semantics<parallel>], iteration_bounds = array<i64: 1>, scalar_prefetch = 0 : i64, scratch_operands = 0 : i64, tpu.core_type = #tpu.core_type<tc>, window_params = [{transform_indices = @transform_0, window_bounds = array<i64: 16, 16>}, {transform_indices = @transform_1, window_bounds = array<i64: 16, 8>}, {pipeline_mode = #tpu.pipeline_mode<synchronous>, transform_indices = @transform_2, window_bounds = array<i64: 16, 32>}, {pipeline_mode = #tpu.pipeline_mode<synchronous>, transform_indices = @transform_3, window_bounds = array<i64: 8, 32>}, {pipeline_mode = #tpu.pipeline_mode<synchronous>, transform_indices = @transform_4, window_bounds = array<i64: 1, 32>}, {pipeline_mode = #tpu.pipeline_mode<synchronous>, transform_indices = @transform_5, window_bounds = array<i64: 32, 32>}, {pipeline_mode = #tpu.pipeline_mode<synchronous>, transform_indices = @transform_6, window_bounds = array<i64: 1, 32>}, {pipeline_mode = #tpu.pipeline_mode<synchronous>, transform_indices = @transform_7, window_bounds = array<i64: 32, 1>}, {pipeline_mode = #tpu.pipeline_mode<synchronous>, transform_indices = @transform_8, window_bounds = array<i64: 1, 1>}, {transform_indices = @transform_9, window_bounds = array<i64: 1, 1, 16>}]} {
    %c0 = arith.constant 0 : index
    %c0_0 = arith.constant 0 : index
    %0 = vector.load %arg1[%c0, %c0_0] : memref<16x16xf32, #tpu.memory_space<vmem>>, vector<16x16xf32>
    %c0_1 = arith.constant 0 : index
    %c0_2 = arith.constant 0 : index
    %1 = vector.load %arg2[%c0_1, %c0_2] : memref<16x8xf32, #tpu.memory_space<vmem>>, vector<16x8xf32>
    %c0_3 = arith.constant 0 : index
    %c0_4 = arith.constant 0 : index
    %2 = vector.load %arg3[%c0_3, %c0_4] : memref<16x32xf32, #tpu.memory_space<vmem>>, vector<16x32xf32>
    %cst = arith.constant dense<0.000000e+00> : vector<16x32xf32>
    %3 = tpu.matmul %0, %2, %cst {dimension_numbers = #tpu.dot_dimension_numbers<[1], [0], [0], [1], [0, 0, 1, 1], [], []>} : vector<16x16xf32>, vector<16x32xf32>, vector<16x32xf32> -> vector<16x32xf32>
    %c0_5 = arith.constant 0 : index
    %c0_6 = arith.constant 0 : index
    %4 = vector.load %arg4[%c0_5, %c0_6] : memref<8x32xf32, #tpu.memory_space<vmem>>, vector<8x32xf32>
    %cst_7 = arith.constant dense<0.000000e+00> : vector<16x32xf32>
    %5 = tpu.matmul %1, %4, %cst_7 {dimension_numbers = #tpu.dot_dimension_numbers<[1], [0], [0], [1], [0, 0, 1, 1], [], []>} : vector<16x8xf32>, vector<8x32xf32>, vector<16x32xf32> -> vector<16x32xf32>
    %6 = arith.addf %3, %5 : vector<16x32xf32>
    %c0_8 = arith.constant 0 : index
    %c0_9 = arith.constant 0 : index
    %7 = vector.load %arg5[%c0_8, %c0_9] : memref<1x32xf32, #tpu.memory_space<vmem>>, vector<1x32xf32>
    %8 = vector.broadcast %7 : vector<1x32xf32> to vector<16x32xf32>
    %9 = arith.addf %6, %8 : vector<16x32xf32>
    %cst_10 = arith.constant 0.000000e+00 : f32
    %10 = vector.broadcast %cst_10 : f32 to vector<16x32xf32>
    %11 = arith.maximumf %9, %10 : vector<16x32xf32>
    %c0_11 = arith.constant 0 : index
    %c0_12 = arith.constant 0 : index
    %12 = vector.load %arg6[%c0_11, %c0_12] : memref<32x32xf32, #tpu.memory_space<vmem>>, vector<32x32xf32>
    %c0_13 = arith.constant 0 : index
    %c0_14 = arith.constant 0 : index
    %13 = vector.load %arg7[%c0_13, %c0_14] : memref<1x32xf32, #tpu.memory_space<vmem>>, vector<1x32xf32>
    %cst_15 = arith.constant dense<0.000000e+00> : vector<16x32xf32>
    %14 = tpu.matmul %11, %12, %cst_15 {dimension_numbers = #tpu.dot_dimension_numbers<[1], [0], [0], [1], [0, 0, 1, 1], [], []>} : vector<16x32xf32>, vector<32x32xf32>, vector<16x32xf32> -> vector<16x32xf32>
    %15 = vector.broadcast %13 : vector<1x32xf32> to vector<16x32xf32>
    %16 = arith.addf %14, %15 : vector<16x32xf32>
    %cst_16 = arith.constant 0.000000e+00 : f32
    %17 = vector.broadcast %cst_16 : f32 to vector<16x32xf32>
    %18 = arith.maximumf %16, %17 : vector<16x32xf32>
    %c0_17 = arith.constant 0 : index
    %c0_18 = arith.constant 0 : index
    %19 = vector.load %arg8[%c0_17, %c0_18] : memref<32x1xf32, #tpu.memory_space<vmem>>, vector<32x1xf32>
    %cst_19 = arith.constant dense<0.000000e+00> : vector<16x1xf32>
    %20 = tpu.matmul %18, %19, %cst_19 {dimension_numbers = #tpu.dot_dimension_numbers<[1], [0], [0], [1], [0, 0, 1, 1], [], []>} : vector<16x32xf32>, vector<32x1xf32>, vector<16x1xf32> -> vector<16x1xf32>
    %c0_20 = arith.constant 0 : index
    %c0_21 = arith.constant 0 : index
    %21 = vector.load %arg9[%c0_20, %c0_21] : memref<1x1xf32, #tpu.memory_space<vmem>>, vector<1x1xf32>
    %22 = vector.broadcast %21 : vector<1x1xf32> to vector<16x1xf32>
    %23 = arith.addf %20, %22 : vector<16x1xf32>
    %24 = tpu.transpose %23, [1, 0] : vector<16x1xf32> -> vector<1x16xf32>
    %cst_22 = arith.constant 1.000000e+00 : f32
    %25 = vector.broadcast %cst_22 : f32 to vector<1x16xf32>
    %26 = arith.subf %24, %25 : vector<1x16xf32>
    %27 = math.tanh %26 : vector<1x16xf32>
    %cst_23 = arith.constant 2.000000e+01 : f32
    %28 = vector.broadcast %cst_23 : f32 to vector<1x16xf32>
    %29 = arith.mulf %27, %28 : vector<1x16xf32>
    %cst_24 = arith.constant 0.000000e+00 : f32
    %30 = vector.broadcast %cst_24 : f32 to vector<1x16xf32>
    %31 = arith.addf %29, %30 : vector<1x16xf32>
    %cst_25 = arith.constant 5.000000e-01 : f32
    %32 = vector.broadcast %cst_25 : f32 to vector<1x16xf32>
    %33 = arith.mulf %31, %32 : vector<1x16xf32>
    %c0_26 = arith.constant 0 : index
    %c0_27 = arith.constant 0 : index
    %c0_28 = arith.constant 0 : index
    %34 = vector.load %arg10[%c0_26, %c0_27, %c0_28] : memref<1x1x16xf32, #tpu.memory_space<vmem>>, vector<1x1x16xf32>
    %35 = vector.shape_cast %34 : vector<1x1x16xf32> to vector<1x16xf32>
    %36 = vector.shape_cast %33 : vector<1x16xf32> to vector<1x1x16xf32>
    tpu.vector_store %arg10[%c0_26, %c0_27, %c0_28], %36 {strides = array<i32>} : memref<1x1x16xf32, #tpu.memory_space<vmem>>, vector<1x1x16xf32>,
    return
  }
  func.func @transform_0(%arg0: i32) -> (i32, i32) {
    %c0_i32 = arith.constant 0 : i32
    %c0_i32_0 = arith.constant 0 : i32
    return %arg0, %c0_i32 : i32, i32
  }
  func.func @transform_1(%arg0: i32) -> (i32, i32) {
    %c0_i32 = arith.constant 0 : i32
    %c0_i32_0 = arith.constant 0 : i32
    return %arg0, %c0_i32 : i32, i32
  }
  func.func @transform_2(%arg0: i32) -> (i32, i32) {
    %c0_i32 = arith.constant 0 : i32
    %c0_i32_0 = arith.constant 0 : i32
    %c0_i32_1 = arith.constant 0 : i32
    return %c0_i32, %c0_i32_0 : i32, i32
  }
  func.func @transform_3(%arg0: i32) -> (i32, i32) {
    %c0_i32 = arith.constant 0 : i32
    %c0_i32_0 = arith.constant 0 : i32
    %c0_i32_1 = arith.constant 0 : i32
    return %c0_i32, %c0_i32_0 : i32, i32
  }
  func.func @transform_4(%arg0: i32) -> (i32, i32) {
    %c0_i32 = arith.constant 0 : i32
    %c0_i32_0 = arith.constant 0 : i32
    %c0_i32_1 = arith.constant 0 : i32
    return %c0_i32, %c0_i32_0 : i32, i32
  }
  func.func @transform_5(%arg0: i32) -> (i32, i32) {
    %c0_i32 = arith.constant 0 : i32
    %c0_i32_0 = arith.constant 0 : i32
    %c0_i32_1 = arith.constant 0 : i32
    return %c0_i32, %c0_i32_0 : i32, i32
  }
  func.func @transform_6(%arg0: i32) -> (i32, i32) {
    %c0_i32 = arith.constant 0 : i32
    %c0_i32_0 = arith.constant 0 : i32
    %c0_i32_1 = arith.constant 0 : i32
    return %c0_i32, %c0_i32_0 : i32, i32
  }
  func.func @transform_7(%arg0: i32) -> (i32, i32) {
    %c0_i32 = arith.constant 0 : i32
    %c0_i32_0 = arith.constant 0 : i32
    %c0_i32_1 = arith.constant 0 : i32
    return %c0_i32, %c0_i32_0 : i32, i32
  }
  func.func @transform_8(%arg0: i32) -> (i32, i32) {
    %c0_i32 = arith.constant 0 : i32
    %c0_i32_0 = arith.constant 0 : i32
    %c0_i32_1 = arith.constant 0 : i32
    return %c0_i32, %c0_i32_0 : i32, i32
  }
  func.func @transform_9(%arg0: i32) -> (i32, i32, i32) {
    %c0_i32 = arith.constant 0 : i32
    %c0_i32_0 = arith.constant 0 : i32
    %c0_i32_1 = arith.constant 0 : i32
    return %arg0, %c0_i32, %c0_i32_0 : i32, i32, i32
  }
}

</mosaic_0001>

<llo_original>
// kernel: tpu_custom_call.1
$region0: #{tpu_custom_call.1}
  #allocation0 [shape = 'u32[]', space=smem, size = 0x4, offset = 0x4, fixed_abs, tag = 'smem constant byte address 0x4 - core index']
  #allocation1 [shape = 'u32[72,128]{1,0:T(1,128)}', space=vmem, size = 0x9000, scoped, tag = 'internal scratch']
  #allocation2 [shape = 'f32[1,1]{1,0:T(1,128)S(1)}', space=vmem, size = 0x200, scoped, tag = 'scoped memory for tpu_custom_call.1']
  %s0 = inlined_call_operand.vmem [shape: f32[16,16], index: 0, kind: input, shape index: {}]
  %s1 = inlined_call_operand.vmem [shape: f32[16,8], index: 1, kind: input, shape index: {}]
  %s2 = inlined_call_operand.hbm [shape: f32[16,32], index: 2, kind: input, shape index: {}]
  %s3 = inlined_call_operand.vmem [shape: f32[8,32], index: 3, kind: input, shape index: {}]
  %s4 = inlined_call_operand.vmem [shape: f32[1,32], index: 4, kind: input, shape index: {}]
  %s5 = inlined_call_operand.vmem [shape: f32[32,32], index: 5, kind: input, shape index: {}]
  %s6 = inlined_call_operand.vmem [shape: f32[1,32], index: 6, kind: input, shape index: {}]
  %s7 = inlined_call_operand.vmem [shape: f32[32,1], index: 7, kind: input, shape index: {}]
  %s8 = inlined_call_operand.<no memory space> [shape: f32[1,1], index: 8, kind: input, shape index: {}]
  %s9 = inlined_call_operand.hbm [shape: f32[1,1,16], index: 9, kind: output, shape index: {}]
  %s10 = sld [smem:[#allocation0]]
  $region50: #{tpu_custom_call.1} parent=0
    _
  %s12 = ssub.s32 1, %s10
  %s13 = scalar_select 0, %s12, %s10
  %v14 = vstv %s8
  %15 = vst [vmem:[#allocation2] sm:$0x1] %v14
  $region1: #{tpu_custom_call.1} parent=0
    #allocation3 [shape = 'u8[8192]{0}', space=vmem, size = 0x2000, scoped, tag = 'input window, operand 2, single buffered']
    #allocation4 [shape = 's32[1]{0}', space=sflag, size = 0x4, scoped, tag = 'scoped memory for tpu_custom_call.1']
    #allocation5 [shape = 's32[1]{0}', space=sflag, size = 0x4, scoped, tag = 'scoped memory for tpu_custom_call.1']
    #allocation6 [shape = 'u8[512]{0}', space=vmem, size = 0x400, scoped, tag = 'output window, operand 0, single buffered']
    %16 = vsyncpa [#allocation4], 0
    %17 = vsyncpa [#allocation5], 0
    // Predicated region
    $region2: #{tpu_custom_call.1} parent=1 // pred_check
      _
    $region3: #{tpu_custom_call.1} parent=1 // pred_check_branch
      %19 = sbr.rel (0) target = $region5
    $region4: #{tpu_custom_call.1} parent=1 // pred_region
      _
    $region5: #{tpu_custom_call.1} parent=1 // pred_fallthru
      _
    // Predicated region
    $region6: #{tpu_custom_call.1} parent=1 // pred_check
      _
    $region7: #{tpu_custom_call.1} parent=1 // pred_check_branch
      %21 = sbr.rel (0) target = $region9
    $region8: #{tpu_custom_call.1} parent=1 // pred_region
      _
    $region9: #{tpu_custom_call.1} parent=1 // pred_fallthru
      _
    // Predicated region
    $region10: #{tpu_custom_call.1} parent=1 // pred_check
      _
    $region11: #{tpu_custom_call.1} parent=1 // pred_check_branch
      %23 = sbr.rel (0) target = $region13
    $region12: #{tpu_custom_call.1} parent=1 // pred_region
      %25 = vsyncadd [#allocation4], 0
      %s26 = sshll.u32 %s2, 4
      %s27 = int_to_ptr.hbm [resolvable:$true] %s26
      %s28 = sshll.u32 [#allocation3], 4
      %s29 = int_to_ptr.vmem [resolvable:$true] %s28
      %34 = dma.hbm_to_vmem [thread:$0]  %s27, 256, %s29, [#allocation4], 128, 128, 8
    $region13: #{tpu_custom_call.1} parent=1 // pred_fallthru
      _
    // Predicated region
    $region14: #{tpu_custom_call.1} parent=1 // pred_check
      _
    $region15: #{tpu_custom_call.1} parent=1 // pred_check_branch
      %36 = sbr.rel (0) target = $region17
    $region16: #{tpu_custom_call.1} parent=1 // pred_region
      _
    $region17: #{tpu_custom_call.1} parent=1 // pred_fallthru
      _
    // Predicated region
    $region18: #{tpu_custom_call.1} parent=1 // pred_check
      _
    $region19: #{tpu_custom_call.1} parent=1 // pred_check_branch
      %38 = sbr.rel (0) target = $region21
    $region20: #{tpu_custom_call.1} parent=1 // pred_region
      _
    $region21: #{tpu_custom_call.1} parent=1 // pred_fallthru
      _
    // Predicated region
    $region22: #{tpu_custom_call.1} parent=1 // pred_check
      _
    $region23: #{tpu_custom_call.1} parent=1 // pred_check_branch
      %40 = sbr.rel (0) target = $region25
    $region24: #{tpu_custom_call.1} parent=1 // pred_region
      _
    $region25: #{tpu_custom_call.1} parent=1 // pred_fallthru
      _
    // Predicated region
    $region26: #{tpu_custom_call.1} parent=1 // pred_check
      _
    $region27: #{tpu_custom_call.1} parent=1 // pred_check_branch
      %42 = sbr.rel (0) target = $region29
    $region28: #{tpu_custom_call.1} parent=1 // pred_region
      _
    $region29: #{tpu_custom_call.1} parent=1 // pred_fallthru
      _
    // Predicated region
    $region30: #{tpu_custom_call.1} parent=1 // pred_check
      _
    $region31: #{tpu_custom_call.1} parent=1 // pred_check_branch
      %44 = sbr.rel (0) target = $region33
    $region32: #{tpu_custom_call.1} parent=1 // pred_region
      _
    $region33: #{tpu_custom_call.1} parent=1 // pred_fallthru
      _
    // Predicated region
    $region34: #{tpu_custom_call.1} parent=1 // pred_check
      _
    $region35: #{tpu_custom_call.1} parent=1 // pred_check_branch
      %46 = sbr.rel (0) target = $region37
    $region36: #{tpu_custom_call.1} parent=1 // pred_region
      _
    $region37: #{tpu_custom_call.1} parent=1 // pred_fallthru
      _
    // Predicated region
    $region38: #{tpu_custom_call.1} parent=1 // pred_check
      _
    $region39: #{tpu_custom_call.1} parent=1 // pred_check_branch
      %48 = sbr.rel (0) target = $region41
    $region40: #{tpu_custom_call.1} parent=1 // pred_region
      %50 = dma.done [#allocation4], 256
    $region41: #{tpu_custom_call.1} parent=1 // pred_fallthru
      _
    %v51 = vld [vmem:[%s0] sm:$0xff]
    %v52 = vld [vmem:[%s0 + $0x8] sm:$0xff]
    %v53 = vld [vmem:[%s1] sm:$0xff]
    %v54 = vld [vmem:[%s1 + $0x8] sm:$0xff]
    %v55 = vld [vmem:[#allocation3] sm:$0xff]
    %v56 = vld [vmem:[#allocation3 + $0x8] sm:$0xff]
    %v57 = vld [vmem:[%s3] sm:$0xff]
    %vm58 = vcmask 64512
    %v60 = vsel %vm58, %v53, 0
    %v63 = vsel %vm58, %v54, 0
    %65 = vmatpush.msra.mxu0 0.0
    %66 = vmatpush.msra.mxu0 0.0
    %67 = vmatpush.msra.mxu0 0.0
    %68 = vmatpush.msra.mxu0 0.0
    %69 = vmatpush.msra.mxu0 0.0
    %70 = vmatpush.msra.mxu0 0.0
    %71 = vmatpush.msra.mxu0 0.0
    %72 = vmatpush.msra.mxu0 0.0
    %73 = vmatpush.msra.mxu0 0.0
    %74 = vmatpush.msra.mxu0 0.0
    %75 = vmatpush.msra.mxu0 0.0
    %76 = vmatpush.msra.mxu0 0.0
    %77 = vmatpush.msra.mxu0 0.0
    %78 = vmatpush.msra.mxu0 0.0
    %79 = vmatpush.msra.mxu0 0.0
    %80 = vmatpush.msra.mxu0 %v57
    %81 = vmatmul.f32.gmra.mxu0 %v60
    %v82 = vpop.f32.mrf.mxu0
    %v83 = vadd.f32 0.0, %v82
    %84 = vmatmul.f32.gmra.mxu0 %v63
    %v85 = vpop.f32.mrf.mxu0
    %v86 = vadd.f32 0.0, %v85
    %87 = vdwg.mxu0
    %vm88 = vcmask 130048
    %v90 = vsel %vm88, %v51, 0
    %v93 = vsel %vm88, %v52, 0
    %95 = vmatpush.msra.mxu0 0.0
    %96 = vmatpush.msra.mxu0 0.0
    %97 = vmatpush.msra.mxu0 0.0
    %98 = vmatpush.msra.mxu0 0.0
    %99 = vmatpush.msra.mxu0 0.0
    %100 = vmatpush.msra.mxu0 0.0
    %101 = vmatpush.msra.mxu0 0.0
    %102 = vmatpush.msra.mxu0 0.0
    %103 = vmatpush.msra.mxu0 0.0
    %104 = vmatpush.msra.mxu0 0.0
    %105 = vmatpush.msra.mxu0 0.0
    %106 = vmatpush.msra.mxu0 0.0
    %107 = vmatpush.msra.mxu0 0.0
    %108 = vmatpush.msra.mxu0 0.0
    %109 = vmatpush.msra.mxu0 %v56
    %110 = vmatpush.msra.mxu0 %v55
    %111 = vmatmul.f32.gmra.mxu0 %v90
    %v112 = vpop.f32.mrf.mxu0
    %v113 = vadd.f32 %v83, %v112
    %114 = vmatmul.f32.gmra.mxu0 %v93
    %v115 = vpop.f32.mrf.mxu0
    %v116 = vadd.f32 %v86, %v115
    %117 = vdwg.mxu0
    %v118 = vld [vmem:[%s4] sm:$0x1]
    %v120 = vperm.slane %v118, 0
    %v122 = vadd.f32 %v113, %v120
    %v123 = vadd.f32 %v116, %v120
    %v124 = vmax.f32 %v122, 0.0
    %v125 = vmax.f32 %v123, 0.0
    %v126 = vld [vmem:[%s5] sm:$0xff]
    %v127 = vld [vmem:[%s5 + $0x8] sm:$0xff]
    %v128 = vld [vmem:[%s5 + $0x10] sm:$0xff]
    %v129 = vld [vmem:[%s5 + $0x18] sm:$0xff]
    %v130 = vld [vmem:[%s6] sm:$0x1]
    %v132 = vperm.slane %v130, 0
    %vm134 = vcmask 261120
    %v136 = vsel %vm134, %v124, 0
    %v139 = vsel %vm134, %v125, 0
    %141 = vmatpush.msra.mxu0 0.0
    %142 = vmatpush.msra.mxu0 0.0
    %143 = vmatpush.msra.mxu0 0.0
    %144 = vmatpush.msra.mxu0 0.0
    %145 = vmatpush.msra.mxu0 0.0
    %146 = vmatpush.msra.mxu0 0.0
    %147 = vmatpush.msra.mxu0 0.0
    %148 = vmatpush.msra.mxu0 0.0
    %149 = vmatpush.msra.mxu0 0.0
    %150 = vmatpush.msra.mxu0 0.0
    %151 = vmatpush.msra.mxu0 0.0
    %152 = vmatpush.msra.mxu0 0.0
    %153 = vmatpush.msra.mxu0 %v129
    %154 = vmatpush.msra.mxu0 %v128
    %155 = vmatpush.msra.mxu0 %v127
    %156 = vmatpush.msra.mxu0 %v126
    %157 = vmatmul.f32.gmra.mxu0 %v136
    %v158 = vpop.f32.mrf.mxu0
    %v159 = vadd.f32 %v132, %v158
    %160 = vmatmul.f32.gmra.mxu0 %v139
    %v161 = vpop.f32.mrf.mxu0
    %v162 = vadd.f32 %v132, %v161
    %163 = vdwg.mxu0
    %v164 = vmax.f32 %v159, 0.0
    %v165 = vmax.f32 %v162, 0.0
    %v166 = vld [vmem:[%s7] sm:$0xff]
    %v167 = vld [vmem:[%s7 + $0x8] sm:$0xff]
    %v168 = vld [vmem:[%s7 + $0x10] sm:$0xff]
    %v169 = vld [vmem:[%s7 + $0x18] sm:$0xff]
    %v170 = vld [vmem:[#allocation2] sm:$0x1]
    %v172 = vperm.slane %v170, 0
    %v175 = vsel %vm134, %v164, 0
    %v178 = vsel %vm134, %v165, 0
    %180 = vmatpush.msra.mxu0 0.0
    %181 = vmatpush.msra.mxu0 0.0
    %182 = vmatpush.msra.mxu0 0.0
    %183 = vmatpush.msra.mxu0 0.0
    %184 = vmatpush.msra.mxu0 0.0
    %185 = vmatpush.msra.mxu0 0.0
    %186 = vmatpush.msra.mxu0 0.0
    %187 = vmatpush.msra.mxu0 0.0
    %188 = vmatpush.msra.mxu0 0.0
    %189 = vmatpush.msra.mxu0 0.0
    %190 = vmatpush.msra.mxu0 0.0
    %191 = vmatpush.msra.mxu0 0.0
    %192 = vmatpush.msra.mxu0 %v169
    %193 = vmatpush.msra.mxu0 %v168
    %194 = vmatpush.msra.mxu0 %v167
    %195 = vmatpush.msra.mxu0 %v166
    %196 = vmatmul.f32.gmra.mxu0 %v175
    %v197 = vpop.f32.mrf.mxu0
    %v198 = vadd.f32 %v172, %v197
    %199 = vmatmul.f32.gmra.mxu0 %v178
    %v200 = vpop.f32.mrf.mxu0
    %v201 = vadd.f32 %v172, %v200
    %202 = vdwg.mxu0
    %203 = vxpose.xlu0.b32.start [1/16] %v198, 128
    %204 = vxpose.xlu0.b32.cont [2/16] %v201, 128
    %205 = vxpose.xlu0.b32.cont [3/16] 0.0, 128
    %206 = vxpose.xlu0.b32.cont [4/16] 0.0, 128
    %207 = vxpose.xlu0.b32.cont [5/16] 0.0, 128
    %208 = vxpose.xlu0.b32.cont [6/16] 0.0, 128
    %209 = vxpose.xlu0.b32.cont [7/16] 0.0, 128
    %210 = vxpose.xlu0.b32.cont [8/16] 0.0, 128
    %211 = vxpose.xlu0.b32.cont [9/16] 0.0, 128
    %212 = vxpose.xlu0.b32.cont [10/16] 0.0, 128
    %213 = vxpose.xlu0.b32.cont [11/16] 0.0, 128
    %214 = vxpose.xlu0.b32.cont [12/16] 0.0, 128
    %215 = vxpose.xlu0.b32.cont [13/16] 0.0, 128
    %216 = vxpose.xlu0.b32.cont [14/16] 0.0, 128
    %217 = vxpose.xlu0.b32.cont [15/16] 0.0, 128
    %218 = vxpose.xlu0.b32.end [16/16] 0.0, 128
    %v219 = vpop.trf.xlu0
    %v220 = vpop.trf.xlu0
    %v221 = vpop.trf.xlu0
    %v222 = vpop.trf.xlu0
    %v223 = vpop.trf.xlu0
    %v224 = vpop.trf.xlu0
    %v225 = vpop.trf.xlu0
    %v226 = vpop.trf.xlu0
    %v227 = vpop.trf.xlu0
    %v228 = vpop.trf.xlu0
    %v229 = vpop.trf.xlu0
    %v230 = vpop.trf.xlu0
    %v231 = vpop.trf.xlu0
    %v232 = vpop.trf.xlu0
    %v233 = vpop.trf.xlu0
    %v234 = vpop.trf.xlu0
    %v235 = vsub.f32 %v219, 1.0
    %v236 = vtanh.pop %v235
    %v237 = vmul.f32 %v236, 20.0
    %v238 = vadd.f32 %v237, 0.0
    %v239 = vmul.f32 %v238, 0.5
    %vm240 = vcmask 122880
    %241 = vst.msk [vmem:[#allocation6] sm:$0x1] %vm240, %v239
    // Predicated region
    $region42: #{tpu_custom_call.1} parent=1 // pred_check
      _
    $region43: #{tpu_custom_call.1} parent=1 // pred_check_branch
      %243 = sbr.rel (0) target = $region45
    $region44: #{tpu_custom_call.1} parent=1 // pred_region
      %245 = vsyncadd [#allocation5], 0
      %s247 = sshll.u32 [#allocation6], 4
      %s248 = int_to_ptr.vmem [resolvable:$true] %s247
      %s249 = sshll.u32 %s9, 4
      %s250 = int_to_ptr.hbm [resolvable:$true] %s249
      %252 = dma.vmem_to_hbm [thread:$0]  %s248, 16, %s250, [#allocation5]
    $region45: #{tpu_custom_call.1} parent=1 // pred_fallthru
      _
    // Predicated region
    $region46: #{tpu_custom_call.1} parent=1 // pred_check
      _
    $region47: #{tpu_custom_call.1} parent=1 // pred_check_branch
      %254 = sbr.rel (0) target = $region49
    $region48: #{tpu_custom_call.1} parent=1 // pred_region
      %256 = dma.done [#allocation5], 16
    $region49: #{tpu_custom_call.1} parent=1 // pred_fallthru
      _
    %257 = vsyncpa [#allocation4], 1
    %258 = vsyncpa [#allocation5], 1

</llo_original>
